<compile_context>
chip_gen: v6e
topology: v6e:2x2x1
jax: 0.10.0
libtpu: 0.0.40
codegen_flags: <defaults>
</compile_context>

<pallas_src>
import jax
import jax.numpy as jnp
from jax.experimental import pallas as pl
from jax.experimental.pallas import tpu as pltpu


# Below this size, pallas_call launch + DMA-issue overhead (~0.5-2 us)
# dominates the actual copy time; let XLA do the copy instead.
_SMALL_BYPASS_BYTES = 1 << 20          # 1 MiB
# Only split the DMA when each chunk still carries a meaningful payload.
_MIN_BYTES_PER_CHUNK = 16 << 20        # 16 MiB
_MAX_CHUNKS = 8


def _make_identity_copy_kernel(chunk_bounds):
    """Build a kernel doing a (possibly chunked) whole-array HBM->HBM copy.

    chunk_bounds: None for a 0-d / unchunkable array (single full-ref DMA),
    otherwise a static list [b0, b1, ..., bn] of leading-dim split points.
    """
    if chunk_bounds is None:
        def kernel(x_hbm, o_hbm, sems):
            cp = pltpu.make_async_copy(x_hbm, o_hbm, sems.at[0])
            cp.start()
            cp.wait()
        return kernel

    n_chunks = len(chunk_bounds) - 1

    def kernel(x_hbm, o_hbm, sems):
        # Issue all chunk DMAs back-to-back (multiple outstanding descriptors
        # hide per-DMA issue latency), then wait on all of them.
        copies = []
        for i in range(n_chunks):
            lo, hi = chunk_bounds[i], chunk_bounds[i + 1]
            cp = pltpu.make_async_copy(
                x_hbm.at[lo:hi], o_hbm.at[lo:hi], sems.at[i]
            )
            cp.start()
            copies.append(cp)
        for cp in copies:
            cp.wait()

    return kernel


def _identity_pallas_copy(x):
    """Materialize a distinct output buffer equal to x via HBM->HBM DMA."""
    nbytes = x.size * x.dtype.itemsize

    # Decide chunking (all static, resolved at trace time).
    if x.ndim == 0 or x.size == 0:
        chunk_bounds = None
        n_chunks = 1
    else:
        lead = x.shape[0]
        n_chunks = int(min(_MAX_CHUNKS, lead,
                           max(1, nbytes // _MIN_BYTES_PER_CHUNK)))
        base, rem = divmod(lead, n_chunks)
        bounds = [0]
        for i in range(n_chunks):
            bounds.append(bounds[-1] + base + (1 if i < rem else 0))
        chunk_bounds = bounds

    kernel = _make_identity_copy_kernel(chunk_bounds)

    return pl.pallas_call(
        kernel,
        out_shape=jax.ShapeDtypeStruct(x.shape, x.dtype),
        in_specs=[pl.BlockSpec(memory_space=pl.ANY)],   # raw HBM ref, no auto-DMA
        out_specs=pl.BlockSpec(memory_space=pl.ANY),    # raw HBM ref, no auto-DMA
        scratch_shapes=[pltpu.SemaphoreType.DMA((n_chunks,))],
        cost_estimate=pl.CostEstimate(
            flops=0, transcendentals=0, bytes_accessed=2 * nbytes
        ),
    )(x)


def identity_pallas(x, *, materialize=False, force_pallas=False):
    """Pallas implementation of Identity.forward.

    Default: returns x unchanged (true identity, zero bytes moved).
    materialize=True: returns a distinct buffer with the same contents,
      using an XLA copy for tiny inputs and a Pallas HBM->HBM DMA otherwise.
    force_pallas=True: always take the Pallas kernel path when materializing.
    """
    if not materialize:
        # The optimal Identity: no copy at all.
        return x

    nbytes = x.size * x.dtype.itemsize
    if not force_pallas and nbytes < _SMALL_BYPASS_BYTES:
        # Tiny input: launch/DMA-issue overhead would dominate; let XLA copy.
        return jnp.copy(x)

    return _identity_pallas_copy(x)


if __name__ == "__main__":
    key = jax.random.PRNGKey(0)
    # Small NCHW input consistent with typical usage (Identity accepts any shape).
    x = jax.random.normal(key, (2, 4, 16, 16), dtype=jnp.float32)

    # Zero-cost identity path (the actual forward semantics).
    y_fast = identity_pallas(x)
    jax.block_until_ready(y_fast)
    assert y_fast.shape == x.shape and y_fast.dtype == x.dtype
    assert bool(jnp.all(y_fast == x)), "fast identity output does not match input"

    # Pallas-materialized copy path (force the kernel so it is exercised even
    # though this input is below the small-size bypass threshold).
    y_copy = identity_pallas(x, materialize=True, force_pallas=True)
    jax.block_until_ready(y_copy)
    assert y_copy.shape == x.shape, f"shape mismatch: {y_copy.shape} vs {x.shape}"
    assert y_copy.dtype == x.dtype, f"dtype mismatch: {y_copy.dtype} vs {x.dtype}"
    assert bool(jnp.all(y_copy == x)), "identity copy output does not match input"

    print("KERNEL_OK")
</pallas_src>

<mosaic_0001>
module attributes {stable_mosaic.version = 11 : i64} {
  func.func @kernel(%arg0: memref<2x4x16x16xf32, #tpu.memory_space<any>>, %arg1: memref<2x4x16x16xf32, #tpu.memory_space<any>>, %arg2: memref<1x!tpu.dma_semaphore, #tpu.memory_space<semaphore_mem>>) attributes {dimension_semantics = [], scalar_prefetch = 0 : i64, scratch_operands = 1 : i64, tpu.core_type = #tpu.core_type<tc>} {
    %c0_i32 = arith.constant 0 : i32
    %c0_i32_0 = arith.constant 0 : i32
    %c0_i32_1 = arith.constant 0 : i32
    %c0_i32_2 = arith.constant 0 : i32
    %c0_i32_3 = arith.constant 0 : i32
    %0 = tpu.memref_slice %arg0[%c0_i32_0, %c0_i32_1, %c0_i32_2, %c0_i32_3] : memref<2x4x16x16xf32, #tpu.memory_space<any>> -> memref<2x4x16x16xf32, #tpu.memory_space<any>>
    %c0_i32_4 = arith.constant 0 : i32
    %c0_i32_5 = arith.constant 0 : i32
    %c0_i32_6 = arith.constant 0 : i32
    %c0_i32_7 = arith.constant 0 : i32
    %1 = tpu.memref_slice %arg1[%c0_i32_4, %c0_i32_5, %c0_i32_6, %c0_i32_7] : memref<2x4x16x16xf32, #tpu.memory_space<any>> -> memref<2x4x16x16xf32, #tpu.memory_space<any>>
    %2 = tpu.memref_slice %arg2[%c0_i32] : memref<1x!tpu.dma_semaphore, #tpu.memory_space<semaphore_mem>> -> memref<1x!tpu.dma_semaphore, #tpu.memory_space<semaphore_mem>>
    %3 = tpu.memref_squeeze %2 : memref<1x!tpu.dma_semaphore, #tpu.memory_space<semaphore_mem>> -> memref<!tpu.dma_semaphore, #tpu.memory_space<semaphore_mem>>
    tpu.enqueue_dma source(%0 : memref<2x4x16x16xf32, #tpu.memory_space<any>>) target(%1 : memref<2x4x16x16xf32, #tpu.memory_space<any>>) target_semaphore(%3 : memref<!tpu.dma_semaphore, #tpu.memory_space<semaphore_mem>>)
    %c0_i32_8 = arith.constant 0 : i32
    %c0_i32_9 = arith.constant 0 : i32
    %c0_i32_10 = arith.constant 0 : i32
    %c0_i32_11 = arith.constant 0 : i32
    %c0_i32_12 = arith.constant 0 : i32
    %4 = tpu.memref_slice %arg0[%c0_i32_9, %c0_i32_10, %c0_i32_11, %c0_i32_12] : memref<2x4x16x16xf32, #tpu.memory_space<any>> -> memref<2x4x16x16xf32, #tpu.memory_space<any>>
    %c0_i32_13 = arith.constant 0 : i32
    %c0_i32_14 = arith.constant 0 : i32
    %c0_i32_15 = arith.constant 0 : i32
    %c0_i32_16 = arith.constant 0 : i32
    %5 = tpu.memref_slice %arg1[%c0_i32_13, %c0_i32_14, %c0_i32_15, %c0_i32_16] : memref<2x4x16x16xf32, #tpu.memory_space<any>> -> memref<2x4x16x16xf32, #tpu.memory_space<any>>
    %6 = tpu.memref_slice %arg2[%c0_i32_8] : memref<1x!tpu.dma_semaphore, #tpu.memory_space<semaphore_mem>> -> memref<1x!tpu.dma_semaphore, #tpu.memory_space<semaphore_mem>>
    %7 = tpu.memref_squeeze %6 : memref<1x!tpu.dma_semaphore, #tpu.memory_space<semaphore_mem>> -> memref<!tpu.dma_semaphore, #tpu.memory_space<semaphore_mem>>
    tpu.wait_dma2 semaphore(%7 : memref<!tpu.dma_semaphore, #tpu.memory_space<semaphore_mem>>) src(%4 : memref<2x4x16x16xf32, #tpu.memory_space<any>>) dst(%5 : memref<2x4x16x16xf32, #tpu.memory_space<any>>)
    return
  }
}

</mosaic_0001>

<llo_original>
// kernel: tpu_custom_call.1
$region0: #{tpu_custom_call.1}
  #allocation0 [shape = 'u32[]', space=smem, size = 0x4, offset = 0x4, fixed_abs, tag = 'smem constant byte address 0x4 - core index']
  #allocation1 [shape = 'u32[144,128]{1,0:T(1,128)}', space=vmem, size = 0x12000, scoped, tag = 'internal scratch']
  #allocation2 [shape = 's32[1]{0}', space=sflag, size = 0x4, scoped, tag = 'scratch operand']
  #allocation3 [shape = 's32[]', space=sflag, size = 0x4, offset = 0, fixed_abs, tag = 'sflag constant byte address 0x0 - dummy sync flag']
  #allocation4 [shape = 'u32[0]{0}', space=smem, size = 0, offset = 0, fixed_abs, tag = 'smem constant byte address 0x0 - null']
  %s0 = inlined_call_operand.hbm [shape: f32[2,4,16,16], index: 0, kind: input, shape index: {}]
  %s1 = inlined_call_operand.hbm [shape: f32[2,4,16,16], index: 1, kind: output, shape index: {}]
  %s2 = sld [smem:[#allocation0]]
  $region2: #{tpu_custom_call.1} parent=0
    _
  %s4 = ssub.s32 1, %s2
  %s5 = scalar_select 0, %s4, %s2
  %s7 = sshll.u32 1, 14
  %s8 = sxor.u32 4294967295, %s7
  %12 = dma.general %s0, 2048, %s1, [#allocation2], 131072, [#allocation4], 0, 0
  %s13 = smul.u32 2, 4
  %s14 = smul.u32 %s13, 16
  %s15 = smul.u32 %s14, 1
  %s16 = sshll.u32 %s15, 4
  %17 = dma.done [#allocation2], %s16
  %18 = vsyncmov [#allocation2]
  %s19 = vpop.sfrf %18
  %p20 = scmp.eq.s32.totalorder %s19, 0
  %p21 = pneg %p20
  %23 = shalt.err (%p21)

</llo_original>
